<compile_context>
chip_gen: v7x
topology: tpu7x:2x2x1
jax: 0.10.0
libtpu: 0.0.40
codegen_flags: <defaults>
</compile_context>

<pallas_src>
import jax
import jax.numpy as jnp
from jax.experimental import pallas as pl
from jax.experimental.pallas import tpu as pltpu

IN_F = 5
HID = 16
OUT_F = 1


def mlp_kernel(xt_ref, w1t_ref, b1_ref, w2_ref, b2_ref, o_ref):
    """One batch tile of  relu(W1 @ x_t + b1) -> W2 @ h + b2, batch on lanes.

    xt_ref : (IN_F, tb)   VMEM -- streamed batch tile (lane-dense)
    w1t_ref: (HID, IN_F)  VMEM -- resident (PyTorch l1.weight layout)
    b1_ref : (HID, 1)     VMEM -- resident
    w2_ref : (OUT_F, HID) VMEM -- resident (PyTorch l2.weight layout)
    b2_ref : (1, 1)       SMEM -- scalar bias
    o_ref  : (1, tb)      VMEM -- lane-dense output row
    """
    # Layer 1 on the MXU, f32 accumulation: (HID, IN_F) @ (IN_F, tb) -> (HID, tb)
    h = jnp.dot(w1t_ref[...], xt_ref[...], preferred_element_type=jnp.float32)
    h = jnp.maximum(h + b1_ref[...], 0.0)

    # Layer 2: (1, HID) @ (HID, tb) -> (1, tb); batch stays on the lane axis.
    y = jnp.dot(w2_ref[...], h, preferred_element_type=jnp.float32)
    o_ref[...] = (y + b2_ref[0, 0]).astype(o_ref.dtype)


def _choose_tb(B, tb):
    """128-aligned lane tiles; split >=2 ways when the batch is big enough (v7x)."""
    if B <= 256:
        return B                              # single full block (layout-legal)
    tb = max(128, (tb // 128) * 128)          # lane-aligned tiles
    half = ((pl.cdiv(B, 2) + 127) // 128) * 128
    return min(tb, half)                      # force nb >= 2 for dual-TC chips


def amodule_forward(x, w1t, b1, w2, b2, *, tb=4096):
    """x: (B, IN_F) f32 -> (B,) f32 (equivalent to AModule.forward).

    w1t = l1.weight (HID, IN_F); b1 = l1.bias as (HID, 1);
    w2  = l2.weight (OUT_F, HID); b2 = l2.bias as (1, 1).
    """
    B = x.shape[0]
    tb = _choose_tb(B, tb)
    nb = pl.cdiv(B, tb)

    x_t = x.T                                  # (IN_F, B): batch on the lane axis

    param_bytes = (HID * IN_F + HID + OUT_F * HID + OUT_F) * 4
    cost = pl.CostEstimate(
        flops=2 * B * (IN_F * HID + HID * OUT_F),
        transcendentals=0,
        bytes_accessed=B * IN_F * 4 + B * 4 + param_bytes,
    )

    out = pl.pallas_call(
        mlp_kernel,
        out_shape=jax.ShapeDtypeStruct((1, nb * tb), jnp.float32),
        grid=(nb,),
        in_specs=[
            pl.BlockSpec((IN_F, tb), lambda i: (0, i)),            # x_t: streamed
            pl.BlockSpec((HID, IN_F), lambda i: (0, 0)),           # w1t: resident
            pl.BlockSpec((HID, 1), lambda i: (0, 0)),              # b1: resident
            pl.BlockSpec((OUT_F, HID), lambda i: (0, 0)),          # w2: resident
            pl.BlockSpec(memory_space=pltpu.MemorySpace.SMEM),     # b2: scalar
        ],
        out_specs=pl.BlockSpec((1, tb), lambda i: (0, i)),
        compiler_params=pltpu.CompilerParams(
            dimension_semantics=("parallel",),   # shard batch tiles across TCs
        ),
        cost_estimate=cost,
    )(x_t, w1t, b1, w2, b2)

    # (1, nb*tb) flat row: reshape is a no-op, slice drops padded ragged columns.
    return out.reshape(nb * tb)[:B]


def init_params(key):
    # Deterministic init mimicking nn.Linear (uniform in +-1/sqrt(fan_in)).
    k1, k2, k3, k4 = jax.random.split(key, 4)
    lim1 = 1.0 / jnp.sqrt(IN_F)
    lim2 = 1.0 / jnp.sqrt(HID)
    w1t = jax.random.uniform(k1, (HID, IN_F), jnp.float32, -lim1, lim1)   # l1.weight
    b1 = jax.random.uniform(k2, (HID, 1), jnp.float32, -lim1, lim1)       # l1.bias
    w2 = jax.random.uniform(k3, (OUT_F, HID), jnp.float32, -lim2, lim2)   # l2.weight
    b2 = jax.random.uniform(k4, (1, 1), jnp.float32, -lim2, lim2)         # l2.bias
    return w1t, b1, w2, b2


if __name__ == "__main__":
    key = jax.random.PRNGKey(0)
    kx, kp = jax.random.split(key)
    w1t, b1, w2, b2 = init_params(kp)

    # B=512: even 2-tile (256+256) split; B=333: ragged last tile (padding path).
    for B in (512, 333):
        x = jax.random.normal(jax.random.fold_in(kx, B), (B, IN_F), jnp.float32)
        y = amodule_forward(x, w1t, b1, w2, b2)
        jax.block_until_ready(y)

        # reference check in plain JAX
        h_ref = jnp.maximum(x @ w1t.T + b1[:, 0], 0.0)
        ref = h_ref @ w2[0] + b2[0, 0]                  # (B,)
        assert y.shape == (B,)
        assert jnp.allclose(y, ref, atol=1e-4, rtol=1e-4), f"mismatch at B={B}"

    print("KERNEL_OK")
</pallas_src>

<mosaic_0001>
module attributes {stable_mosaic.version = 11 : i64} {
  func.func @mlp_kernel(%arg0: i32, %arg1: memref<5x256xf32, #tpu.memory_space<vmem>>, %arg2: memref<16x5xf32, #tpu.memory_space<vmem>>, %arg3: memref<16x1xf32, #tpu.memory_space<vmem>>, %arg4: memref<1x16xf32, #tpu.memory_space<vmem>>, %arg5: memref<1x1xf32, #tpu.memory_space<smem>>, %arg6: memref<1x256xf32, #tpu.memory_space<vmem>>) attributes {dimension_semantics = [#tpu.dimension_semantics<parallel>], iteration_bounds = array<i64: 2>, scalar_prefetch = 0 : i64, scratch_operands = 0 : i64, tpu.core_type = #tpu.core_type<tc>, window_params = [{transform_indices = @transform_0, window_bounds = array<i64: 5, 256>}, {pipeline_mode = #tpu.pipeline_mode<synchronous>, transform_indices = @transform_1, window_bounds = array<i64: 16, 5>}, {pipeline_mode = #tpu.pipeline_mode<synchronous>, transform_indices = @transform_2, window_bounds = array<i64: 16, 1>}, {pipeline_mode = #tpu.pipeline_mode<synchronous>, transform_indices = @transform_3, window_bounds = array<i64: 1, 16>}, {transform_indices = @transform_4, window_bounds = array<i64: 1, 1>}, {transform_indices = @transform_5, window_bounds = array<i64: 1, 256>}]} {
    %c0 = arith.constant 0 : index
    %c0_0 = arith.constant 0 : index
    %0 = vector.load %arg2[%c0, %c0_0] : memref<16x5xf32, #tpu.memory_space<vmem>>, vector<16x5xf32>
    %c0_1 = arith.constant 0 : index
    %c0_2 = arith.constant 0 : index
    %1 = vector.load %arg1[%c0_1, %c0_2] : memref<5x256xf32, #tpu.memory_space<vmem>>, vector<5x256xf32>
    %cst = arith.constant dense<0.000000e+00> : vector<16x256xf32>
    %2 = tpu.matmul %0, %1, %cst {dimension_numbers = #tpu.dot_dimension_numbers<[1], [0], [0], [1], [0, 0, 1, 1], [], []>} : vector<16x5xf32>, vector<5x256xf32>, vector<16x256xf32> -> vector<16x256xf32>
    %c0_3 = arith.constant 0 : index
    %c0_4 = arith.constant 0 : index
    %3 = vector.load %arg3[%c0_3, %c0_4] : memref<16x1xf32, #tpu.memory_space<vmem>>, vector<16x1xf32>
    %4 = vector.broadcast %3 : vector<16x1xf32> to vector<16x256xf32>
    %5 = arith.addf %2, %4 : vector<16x256xf32>
    %cst_5 = arith.constant 0.000000e+00 : f32
    %6 = vector.broadcast %cst_5 : f32 to vector<16x256xf32>
    %7 = arith.maximumf %5, %6 : vector<16x256xf32>
    %c0_6 = arith.constant 0 : index
    %c0_7 = arith.constant 0 : index
    %8 = vector.load %arg4[%c0_6, %c0_7] : memref<1x16xf32, #tpu.memory_space<vmem>>, vector<1x16xf32>
    %cst_8 = arith.constant dense<0.000000e+00> : vector<1x256xf32>
    %9 = tpu.matmul %8, %7, %cst_8 {dimension_numbers = #tpu.dot_dimension_numbers<[1], [0], [0], [1], [0, 0, 1, 1], [], []>} : vector<1x16xf32>, vector<16x256xf32>, vector<1x256xf32> -> vector<1x256xf32>
    %c0_9 = arith.constant 0 : index
    %c0_10 = arith.constant 0 : index
    %10 = memref.load %arg5[%c0_9, %c0_10] : memref<1x1xf32, #tpu.memory_space<smem>>
    %11 = vector.broadcast %10 : f32 to vector<1x256xf32>
    %12 = arith.addf %9, %11 : vector<1x256xf32>
    %c0_11 = arith.constant 0 : index
    %c0_12 = arith.constant 0 : index
    %13 = vector.load %arg6[%c0_11, %c0_12] : memref<1x256xf32, #tpu.memory_space<vmem>>, vector<1x256xf32>
    tpu.vector_store %arg6[%c0_11, %c0_12], %12 {strides = array<i32>} : memref<1x256xf32, #tpu.memory_space<vmem>>, vector<1x256xf32>,
    return
  }
  func.func @transform_0(%arg0: i32) -> (i32, i32) {
    %c0_i32 = arith.constant 0 : i32
    %c0_i32_0 = arith.constant 0 : i32
    return %c0_i32, %arg0 : i32, i32
  }
  func.func @transform_1(%arg0: i32) -> (i32, i32) {
    %c0_i32 = arith.constant 0 : i32
    %c0_i32_0 = arith.constant 0 : i32
    %c0_i32_1 = arith.constant 0 : i32
    return %c0_i32, %c0_i32_0 : i32, i32
  }
  func.func @transform_2(%arg0: i32) -> (i32, i32) {
    %c0_i32 = arith.constant 0 : i32
    %c0_i32_0 = arith.constant 0 : i32
    %c0_i32_1 = arith.constant 0 : i32
    return %c0_i32, %c0_i32_0 : i32, i32
  }
  func.func @transform_3(%arg0: i32) -> (i32, i32) {
    %c0_i32 = arith.constant 0 : i32
    %c0_i32_0 = arith.constant 0 : i32
    %c0_i32_1 = arith.constant 0 : i32
    return %c0_i32, %c0_i32_0 : i32, i32
  }
  func.func @transform_4(%arg0: i32) -> (i32, i32) {
    %c0_i32 = arith.constant 0 : i32
    %c0_i32_0 = arith.constant 0 : i32
    %c0_i32_1 = arith.constant 0 : i32
    return %c0_i32, %c0_i32_0 : i32, i32
  }
  func.func @transform_5(%arg0: i32) -> (i32, i32) {
    %c0_i32 = arith.constant 0 : i32
    %c0_i32_0 = arith.constant 0 : i32
    return %c0_i32, %arg0 : i32, i32
  }
}

</mosaic_0001>

<llo_original>
// kernel: tpu_custom_call.1
$region0: #{tpu_custom_call.1}
  #allocation0 [shape = 'u32[]', space=smem, size = 0x4, offset = 0x4, fixed_abs, tag = 'smem constant byte address 0x4 - core index']
  #allocation1 [shape = 'u32[144,128]{1,0:T(1,128)}', space=vmem, size = 0x12000, scoped, tag = 'internal scratch']
  #allocation2 [shape = 'f32[1,1]{1,0:T(1,128)S(6)}', space=smem, size = 0x200, scoped, tag = 'scoped memory for tpu_custom_call.1']
  %s0 = inlined_call_operand.vmem [shape: f32[5,512], index: 0, kind: input, shape index: {}]
  %s1 = inlined_call_operand.vmem [shape: f32[16,5], index: 1, kind: input, shape index: {}]
  %s2 = inlined_call_operand.vmem [shape: f32[16,1], index: 2, kind: input, shape index: {}]
  %s3 = inlined_call_operand.vmem [shape: f32[1,16], index: 3, kind: input, shape index: {}]
  %s4 = inlined_call_operand.<no memory space> [shape: f32[1,1], index: 4, kind: input, shape index: {}]
  %s5 = inlined_call_operand.hbm [shape: f32[1,512], index: 5, kind: output, shape index: {}]
  %s6 = sld [smem:[#allocation0]]
  $region53: #{tpu_custom_call.1} parent=0
    _
  %s8 = ssub.s32 1, %s6
  %s9 = scalar_select 0, %s8, %s6
  %10 = sst [smem:[#allocation2]] %s4
  $region1: #{tpu_custom_call.1} parent=0
    #allocation3 [shape = 'u8[2048]{0}', space=vmem, size = 0x800, scoped, tag = 'output window, operand 0']
    #allocation4 [shape = 's32[2]{0}', space=sflag, size = 0x8, scoped, tag = 'scoped memory for tpu_custom_call.1']
    %11 = vsyncpa [#allocation4], 0
    %s12 = scalar_lea.sflag [#allocation4], 1
    %13 = vsyncpa %s12, 0
    loop: start=0, step=1, limit=4
    $region2: #{tpu_custom_call.1} parent=1 // loop_pre_header
      _
    $region3: #{tpu_custom_call.1} parent=1 // loop_header
      %s15 = sphi 0, %s19
      %p16 = scmp.ge.s32.totalorder %s15, 4
      %s25 = sphi 0, %s27
      %s28 = sphi 0, %s25
      %s29 = sphi 0, %s28
      %s45 = sphi 0, %s29
      %s49 = sphi 0, %s49
      %s51 = sphi 0, %s49
      %s52 = sphi 0, %s51
      %s66 = sphi 0, %s52
      %s70 = sphi 0, %s70
      %s72 = sphi 0, %s70
      %s73 = sphi 0, %s72
      %s87 = sphi 0, %s73
      %s91 = sphi 0, %s91
      %s93 = sphi 0, %s91
      %s94 = sphi 0, %s93
      %s108 = sphi 0, %s94
      %s112 = sphi 0, %s112
      %s114 = sphi 0, %s112
      %s115 = sphi 0, %s114
      %s129 = sphi 0, %s115
      %s135 = sphi 0, %s137
      %s138 = sphi 0, %s135
      %s139 = sphi 0, %s138
      %s155 = sphi 0, %s139
    $region4: #{tpu_custom_call.1} parent=1 // loop_header_branch
      %18 = sbr.rel (%p16) target = $region8
    $region5: #{tpu_custom_call.1} parent=1 // loop_body
      %s20 = ssub.s32 %s15, 1
      %s21 = ssub.s32 %s15, 2
      %s22 = sadd.s32 %s15, 1
      %s23 = ssub.s32 %s15, %s22
      %p24 = scmp.eq.s32.totalorder %s23, 0
      %s26 = sadd.s32 %s25, 1
      %s27 = scalar_select %p24, %s25, %s26
      %p30 = pneg %p24
      %p31 = scmp.eq.s32.totalorder %s15, 1
      %p32 = por %p30, %p31
      %p33 = scmp.ne.s32.totalorder %s25, %s28
      %p34 = scmp.eq.s32.totalorder %s15, 0
      %p35 = por %p33, %p34
      %p36 = scmp.ne.s32.totalorder %s25, %s28
      %p37 = scmp.eq.s32.totalorder %s20, 1
      %p38 = por %p36, %p37
      %p39 = scmp.ne.s32.totalorder %s28, %s29
      %p40 = scmp.eq.s32.totalorder %s20, 0
      %p41 = por %p39, %p40
      %p42 = scmp.ne.s32.totalorder %s28, %s29
      %p43 = scmp.eq.s32.totalorder %s21, 1
      %p44 = por %p42, %p43
      %p46 = scmp.ne.s32.totalorder %s29, %s45
      %p47 = scmp.eq.s32.totalorder %s21, 0
      %p48 = por %p46, %p47
      %s50 = sadd.s32 %s49, 1
      %p53 = scmp.eq.s32.totalorder %s15, 1
      %p54 = scmp.ne.s32.totalorder %s49, %s51
      %p55 = scmp.eq.s32.totalorder %s15, 0
      %p56 = por %p54, %p55
      %p57 = scmp.ne.s32.totalorder %s49, %s51
      %p58 = scmp.eq.s32.totalorder %s20, 1
      %p59 = por %p57, %p58
      %p60 = scmp.ne.s32.totalorder %s51, %s52
      %p61 = scmp.eq.s32.totalorder %s20, 0
      %p62 = por %p60, %p61
      %p63 = scmp.ne.s32.totalorder %s51, %s52
      %p64 = scmp.eq.s32.totalorder %s21, 1
      %p65 = por %p63, %p64
      %p67 = scmp.ne.s32.totalorder %s52, %s66
      %p68 = scmp.eq.s32.totalorder %s21, 0
      %p69 = por %p67, %p68
      %s71 = sadd.s32 %s70, 1
      %p74 = scmp.eq.s32.totalorder %s15, 1
      %p75 = scmp.ne.s32.totalorder %s70, %s72
      %p76 = scmp.eq.s32.totalorder %s15, 0
      %p77 = por %p75, %p76
      %p78 = scmp.ne.s32.totalorder %s70, %s72
      %p79 = scmp.eq.s32.totalorder %s20, 1
      %p80 = por %p78, %p79
      %p81 = scmp.ne.s32.totalorder %s72, %s73
      %p82 = scmp.eq.s32.totalorder %s20, 0
      %p83 = por %p81, %p82
      %p84 = scmp.ne.s32.totalorder %s72, %s73
      %p85 = scmp.eq.s32.totalorder %s21, 1
      %p86 = por %p84, %p85
      %p88 = scmp.ne.s32.totalorder %s73, %s87
      %p89 = scmp.eq.s32.totalorder %s21, 0
      %p90 = por %p88, %p89
      %s92 = sadd.s32 %s91, 1
      %p95 = scmp.eq.s32.totalorder %s15, 1
      %p96 = scmp.ne.s32.totalorder %s91, %s93
      %p97 = scmp.eq.s32.totalorder %s15, 0
      %p98 = por %p96, %p97
      %p99 = scmp.ne.s32.totalorder %s91, %s93
      %p100 = scmp.eq.s32.totalorder %s20, 1
      %p101 = por %p99, %p100
      %p102 = scmp.ne.s32.totalorder %s93, %s94
      %p103 = scmp.eq.s32.totalorder %s20, 0
      %p104 = por %p102, %p103
      %p105 = scmp.ne.s32.totalorder %s93, %s94
      %p106 = scmp.eq.s32.totalorder %s21, 1
      %p107 = por %p105, %p106
      %p109 = scmp.ne.s32.totalorder %s94, %s108
      %p110 = scmp.eq.s32.totalorder %s21, 0
      %p111 = por %p109, %p110
      %s113 = sadd.s32 %s112, 1
      %p116 = scmp.eq.s32.totalorder %s15, 1
      %p117 = scmp.ne.s32.totalorder %s112, %s114
      %p118 = scmp.eq.s32.totalorder %s15, 0
      %p119 = por %p117, %p118
      %p120 = scmp.ne.s32.totalorder %s112, %s114
      %p121 = scmp.eq.s32.totalorder %s20, 1
      %p122 = por %p120, %p121
      %p123 = scmp.ne.s32.totalorder %s114, %s115
      %p124 = scmp.eq.s32.totalorder %s20, 0
      %p125 = por %p123, %p124
      %p126 = scmp.ne.s32.totalorder %s114, %s115
      %p127 = scmp.eq.s32.totalorder %s21, 1
      %p128 = por %p126, %p127
      %p130 = scmp.ne.s32.totalorder %s115, %s129
      %p131 = scmp.eq.s32.totalorder %s21, 0
      %p132 = por %p130, %p131
      %s133 = ssub.s32 %s15, %s22
      %p134 = scmp.eq.s32.totalorder %s133, 0
      %s136 = sadd.s32 %s135, 1
      %s137 = scalar_select %p134, %s135, %s136
      %p140 = pneg %p134
      %p141 = scmp.eq.s32.totalorder %s15, 1
      %p142 = por %p140, %p141
      %p143 = scmp.ne.s32.totalorder %s135, %s138
      %p144 = scmp.eq.s32.totalorder %s15, 0
      %p145 = por %p143, %p144
      %p146 = scmp.ne.s32.totalorder %s135, %s138
      %p147 = scmp.eq.s32.totalorder %s20, 1
      %p148 = por %p146, %p147
      %p149 = scmp.ne.s32.totalorder %s138, %s139
      %p150 = scmp.eq.s32.totalorder %s20, 0
      %p151 = por %p149, %p150
      %p152 = scmp.ne.s32.totalorder %s138, %s139
      %p153 = scmp.eq.s32.totalorder %s21, 1
      %p154 = por %p152, %p153
      %p156 = scmp.ne.s32.totalorder %s139, %s155
      %p157 = scmp.eq.s32.totalorder %s21, 0
      %p158 = por %p156, %p157
      %p159 = scmp.le.s32.totalorder 1, %s15
      %p160 = scmp.lt.s32.totalorder %s15, 3
      %p161 = pnand %p159, %p160
      %p162 = pneg %p161
      // Predicated region
      $region9: #{tpu_custom_call.1} parent=5 // pred_check
        _
      $region10: #{tpu_custom_call.1} parent=5 // pred_check_branch
        %164 = sbr.rel (%p161) target = $region12
      $region11: #{tpu_custom_call.1} parent=5 // pred_region
        %s165 = ssub.s32 %s15, 1
        // Predicated region
        $region13: #{tpu_custom_call.1} parent=11 // pred_check
          %p166 = pneg %p62
        $region14: #{tpu_custom_call.1} parent=11 // pred_check_branch
          %168 = sbr.rel (%p166) target = $region16
        $region15: #{tpu_custom_call.1} parent=11 // pred_region
          _
        $region16: #{tpu_custom_call.1} parent=11 // pred_fallthru
          _
        // Predicated region
        $region17: #{tpu_custom_call.1} parent=11 // pred_check
          %p169 = pneg %p83
        $region18: #{tpu_custom_call.1} parent=11 // pred_check_branch
          %171 = sbr.rel (%p169) target = $region20
        $region19: #{tpu_custom_call.1} parent=11 // pred_region
          _
        $region20: #{tpu_custom_call.1} parent=11 // pred_fallthru
          _
        // Predicated region
        $region21: #{tpu_custom_call.1} parent=11 // pred_check
          %p172 = pneg %p104
        $region22: #{tpu_custom_call.1} parent=11 // pred_check_branch
          %174 = sbr.rel (%p172) target = $region24
        $region23: #{tpu_custom_call.1} parent=11 // pred_region
          _
        $region24: #{tpu_custom_call.1} parent=11 // pred_fallthru
          _
        // Predicated region
        $region25: #{tpu_custom_call.1} parent=11 // pred_check
          %p175 = pneg %p125
        $region26: #{tpu_custom_call.1} parent=11 // pred_check_branch
          %177 = sbr.rel (%p175) target = $region28
        $region27: #{tpu_custom_call.1} parent=11 // pred_region
          _
        $region28: #{tpu_custom_call.1} parent=11 // pred_fallthru
          _
      $region12: #{tpu_custom_call.1} parent=5 // pred_fallthru
        _
      %p178 = scmp.lt.s32.totalorder %s15, 2
      // Predicated region
      $region29: #{tpu_custom_call.1} parent=5 // pred_check
        %p179 = pneg %p178
      $region30: #{tpu_custom_call.1} parent=5 // pred_check_branch
        %181 = sbr.rel (%p179) target = $region32
      $region31: #{tpu_custom_call.1} parent=5 // pred_region
        // Predicated region
        $region33: #{tpu_custom_call.1} parent=31 // pred_check
          %p182 = pneg %p35
        $region34: #{tpu_custom_call.1} parent=31 // pred_check_branch
          %184 = sbr.rel (%p182) target = $region36
        $region35: #{tpu_custom_call.1} parent=31 // pred_region
          %s185 = smul.u32 2, %s15
          %p186 = scmp.lt.s32.totalorder %s185, 3
          %s187 = scalar_select %p186, %s185, 3
          %s188 = smul.addr %s187, 8
          %s189 = scalar_lea.vmem %s0, %s188
          %s190 = smul.u32 2, %s15
        $region36: #{tpu_custom_call.1} parent=31 // pred_fallthru
          _
      $region32: #{tpu_custom_call.1} parent=5 // pred_fallthru
        _
      %p191 = scmp.le.s32.totalorder 1, %s15
      %p192 = scmp.lt.s32.totalorder %s15, 3
      %p193 = pnand %p191, %p192
      %p194 = pneg %p193
      // Predicated region
      $region37: #{tpu_custom_call.1} parent=5 // pred_check
        _
      $region38: #{tpu_custom_call.1} parent=5 // pred_check_branch
        %196 = sbr.rel (%p193) target = $region40
      $region39: #{tpu_custom_call.1} parent=5 // pred_region
        %s197 = ssub.s32 %s15, 1
        %s198 = smul.u32 2, %s20
        %p199 = scmp.lt.s32.totalorder %s198, 3
        %s200 = scalar_select %p199, %s198, 3
        %s201 = smul.addr %s200, 8
        %s202 = scalar_lea.vmem %s0, %s201
        %p203 = pneg %p41
        %p204 = pneg %p38
        %p205 = pneg %p62
        %p206 = pneg %p59
        %p207 = pneg %p83
        %p208 = pneg %p80
        %p209 = pneg %p104
        %p210 = pneg %p101
        %p211 = pneg %p125
        %p212 = pneg %p122
        %p213 = pneg %p151
        %p214 = pneg %p148
        %s215 = sand.u32 %s138, 1
        %s216 = scalar_lea.sflag [#allocation4], %s215
        %s217 = sand.u32 %s138, 1
        %s218 = smul.addr %s217, 2
        %s219 = scalar_lea.vmem [#allocation3], %s218
        %s220 = smul.u32 2, %s20
        %p221 = scmp.lt.s32.totalorder %s220, 3
        %s222 = scalar_select %p221, %s220, 3
        %s223 = smul.addr %s222, 8
        %s224 = scalar_lea.vmem %s0, %s223
        %s225 = smul.u32 2, %s20
        %s226 = smul.u32 2, %s20
        %v227 = vld [vmem:[%s1] sm:$0xff]
        %v228 = vld [vmem:[%s1 + $0x8] sm:$0xff]
        %v229 = vld [vmem:[%s224] sm:$0x1f]
        %v230 = vld [vmem:[%s224 + $0x8] sm:$0x1f]
        %v231 = vld [vmem:[%s2] sm:$0xff]
        %v232 = vld [vmem:[%s2 + $0x8] sm:$0xff]
        %234 = vset.pattern.permute.xlu0 0
        %235 = vperm.xlu0 %234, %v231
        %v236 = vpop.permute.xlu0 %235
        %239 = vset.pattern.permute.xlu0 0
        %240 = vperm.xlu0 %239, %v232
        %v241 = vpop.permute.xlu0 %240
        %vm243 = vcmask 39936
        %v245 = vsel %vm243, %v227, 0
        %v248 = vsel %vm243, %v228, 0
        %vm250 = vcmask 1044480
        %v252 = vsel %vm250, %v229, 0
        %v255 = vsel %vm250, %v230, 0
        %257 = vmatprep.subr.mxu0 %v255
        %258 = vmatpush1.msra.mxu0 %v252
        %259 = vmatprep.subr.mxu0 0.0
        %260 = vmatpush1.msra.mxu0 0.0
        %261 = vmatprep.subr.mxu0 0.0
        %262 = vmatpush1.msra.mxu0 0.0
        %263 = vmatprep.subr.mxu0 0.0
        %264 = vmatpush1.msra.mxu0 0.0
        %265 = vmatprep.subr.mxu0 0.0
        %266 = vmatpush1.msra.mxu0 0.0
        %267 = vmatprep.subr.mxu0 0.0
        %268 = vmatpush1.msra.mxu0 0.0
        %269 = vmatprep.subr.mxu0 0.0
        %270 = vmatpush1.msra.mxu0 0.0
        %271 = vmatprep.subr.mxu0 0.0
        %272 = vmatpush1.msra.mxu0 0.0
        %273 = vmatprep.subr.mxu0 0.0
        %274 = vmatpush1.msra.mxu0 0.0
        %275 = vmatprep.subr.mxu0 0.0
        %276 = vmatpush1.msra.mxu0 0.0
        %277 = vmatprep.subr.mxu0 0.0
        %278 = vmatpush1.msra.mxu0 0.0
        %279 = vmatprep.subr.mxu0 0.0
        %280 = vmatpush1.msra.mxu0 0.0
        %281 = vmatprep.subr.mxu0 0.0
        %282 = vmatpush1.msra.mxu0 0.0
        %283 = vmatprep.subr.mxu0 0.0
        %284 = vmatpush1.msra.mxu0 0.0
        %285 = vmatprep.subr.mxu0 0.0
        %286 = vmatpush1.msra.mxu0 0.0
        %287 = vmatprep.subr.mxu0 0.0
        %288 = vmatpush1.msra.mxu0 0.0
        %289 = vmatprep.subr.mxu0 0.0
        %290 = vmatpush1.msra.mxu0 0.0
        %291 = vmatprep.subr.mxu0 0.0
        %292 = vmatpush1.msra.mxu0 0.0
        %293 = vmatprep.subr.mxu0 0.0
        %294 = vmatpush1.msra.mxu0 0.0
        %295 = vmatprep.subr.mxu0 0.0
        %296 = vmatpush1.msra.mxu0 0.0
        %297 = vmatprep.subr.mxu0 0.0
        %298 = vmatpush1.msra.mxu0 0.0
        %299 = vmatprep.subr.mxu0 0.0
        %300 = vmatpush1.msra.mxu0 0.0
        %301 = vmatprep.subr.mxu0 0.0
        %302 = vmatpush1.msra.mxu0 0.0
        %303 = vmatprep.subr.mxu0 0.0
        %304 = vmatpush1.msra.mxu0 0.0
        %305 = vmatprep.subr.mxu0 0.0
        %306 = vmatpush1.msra.mxu0 0.0
        %307 = vmatprep.subr.mxu0 0.0
        %308 = vmatpush1.msra.mxu0 0.0
        %309 = vmatprep.subr.mxu0 0.0
        %310 = vmatpush1.msra.mxu0 0.0
        %311 = vmatprep.subr.mxu0 0.0
        %312 = vmatpush1.msra.mxu0 0.0
        %313 = vmatprep.subr.mxu0 0.0
        %314 = vmatpush1.msra.mxu0 0.0
        %315 = vmatprep.subr.mxu0 0.0
        %316 = vmatpush1.msra.mxu0 0.0
        %317 = vmatprep.subr.mxu0 0.0
        %318 = vmatpush1.msra.mxu0 0.0
        %319 = vmatprep.subr.mxu0 0.0
        %320 = vmatpush1.msra.mxu0 0.0
        %321 = vmatprep.mubr.f32.mxu0 0.0
        %322 = vmatmul.mubr.f32.gmra.mrb[0].mxu0 %v245
        %v323 = vpop.f32.mrb[0].mxu0
        %v324 = vadd.f32 %v236, %v323
        %v325 = vpop.f32.mrb[0].mxu0
        %v326 = vadd.f32 %v236, %v325
        %327 = vmatprep.mubr.f32.mxu0 0.0
        %328 = vmatmul.mubr.f32.gmra.mrb[0].mxu0 %v248
        %v329 = vpop.f32.mrb[0].mxu0
        %v330 = vadd.f32 %v241, %v329
        %v331 = vpop.f32.mrb[0].mxu0
        %v332 = vadd.f32 %v241, %v331
        %333 = vdwg.mxu0
        %v334 = vmax.f32 %v324, 0.0
        %v335 = vmax.f32 %v326, 0.0
        %v336 = vmax.f32 %v330, 0.0
        %v337 = vmax.f32 %v332, 0.0
        %v338 = vld [vmem:[%s3] sm:$0x1]
        %s339 = sld [smem:[#allocation2]]
        %v340 = vstv %s339
        %vm341 = vcmask 130048
        %v343 = vsel %vm341, %v338, 0
        %345 = vmatprep.subr.mxu0 %v335
        %346 = vmatpush1.msra.mxu0 %v334
        %347 = vmatprep.subr.mxu0 %v337
        %348 = vmatpush1.msra.mxu0 %v336
        %349 = vmatprep.subr.mxu0 0.0
        %350 = vmatpush1.msra.mxu0 0.0
        %351 = vmatprep.subr.mxu0 0.0
        %352 = vmatpush1.msra.mxu0 0.0
        %353 = vmatprep.subr.mxu0 0.0
        %354 = vmatpush1.msra.mxu0 0.0
        %355 = vmatprep.subr.mxu0 0.0
        %356 = vmatpush1.msra.mxu0 0.0
        %357 = vmatprep.subr.mxu0 0.0
        %358 = vmatpush1.msra.mxu0 0.0
        %359 = vmatprep.subr.mxu0 0.0
        %360 = vmatpush1.msra.mxu0 0.0
        %361 = vmatprep.subr.mxu0 0.0
        %362 = vmatpush1.msra.mxu0 0.0
        %363 = vmatprep.subr.mxu0 0.0
        %364 = vmatpush1.msra.mxu0 0.0
        %365 = vmatprep.subr.mxu0 0.0
        %366 = vmatpush1.msra.mxu0 0.0
        %367 = vmatprep.subr.mxu0 0.0
        %368 = vmatpush1.msra.mxu0 0.0
        %369 = vmatprep.subr.mxu0 0.0
        %370 = vmatpush1.msra.mxu0 0.0
        %371 = vmatprep.subr.mxu0 0.0
        %372 = vmatpush1.msra.mxu0 0.0
        %373 = vmatprep.subr.mxu0 0.0
        %374 = vmatpush1.msra.mxu0 0.0
        %375 = vmatprep.subr.mxu0 0.0
        %376 = vmatpush1.msra.mxu0 0.0
        %377 = vmatprep.subr.mxu0 0.0
        %378 = vmatpush1.msra.mxu0 0.0
        %379 = vmatprep.subr.mxu0 0.0
        %380 = vmatpush1.msra.mxu0 0.0
        %381 = vmatprep.subr.mxu0 0.0
        %382 = vmatpush1.msra.mxu0 0.0
        %383 = vmatprep.subr.mxu0 0.0
        %384 = vmatpush1.msra.mxu0 0.0
        %385 = vmatprep.subr.mxu0 0.0
        %386 = vmatpush1.msra.mxu0 0.0
        %387 = vmatprep.subr.mxu0 0.0
        %388 = vmatpush1.msra.mxu0 0.0
        %389 = vmatprep.subr.mxu0 0.0
        %390 = vmatpush1.msra.mxu0 0.0
        %391 = vmatprep.subr.mxu0 0.0
        %392 = vmatpush1.msra.mxu0 0.0
        %393 = vmatprep.subr.mxu0 0.0
        %394 = vmatpush1.msra.mxu0 0.0
        %395 = vmatprep.subr.mxu0 0.0
        %396 = vmatpush1.msra.mxu0 0.0
        %397 = vmatprep.subr.mxu0 0.0
        %398 = vmatpush1.msra.mxu0 0.0
        %399 = vmatprep.subr.mxu0 0.0
        %400 = vmatpush1.msra.mxu0 0.0
        %401 = vmatprep.subr.mxu0 0.0
        %402 = vmatpush1.msra.mxu0 0.0
        %403 = vmatprep.subr.mxu0 0.0
        %404 = vmatpush1.msra.mxu0 0.0
        %405 = vmatprep.subr.mxu0 0.0
        %406 = vmatpush1.msra.mxu0 0.0
        %407 = vmatprep.subr.mxu0 0.0
        %408 = vmatpush1.msra.mxu0 0.0
        %409 = vmatprep.mubr.f32.mxu0 0.0
        %410 = vmatmul.mubr.f32.gmra.mrb[0].mxu0 %v343
        %v411 = vpop.f32.mrb[0].mxu0
        %v412 = vadd.f32 %v340, %v411
        %v413 = vpop.f32.mrb[0].mxu0
        %v414 = vadd.f32 %v340, %v413
        %415 = vdwg.mxu0
        %v418 = vcombine.low %v412, %v414
        %v420 = vunpack.c.l.s4 1966171168
        %v421 = vunpack.c.0.s8 %v420
        %v422 = vlaneseq
        %v423 = vshrl.u32 %v422, 7
        %v424 = vsub.s32 %v421, %v423
        %v425 = vrot.slane %v418, %v424
        %v427 = vunpack.c.l.s4 1966171168
        %v428 = vunpack.c.0.s8 %v427
        %v429 = vlaneseq
        %v430 = vshrl.u32 %v429, 7
        %v431 = vsub.s32 %v428, %v430
        %v432 = vrot.slane %v425, %v431
        %v434 = vlaneseq
        %vm435 = vcmp.ge.s32.totalorder %v434, 0
        %vm436 = vcmp.lt.s32.totalorder %v434, 256
        %vm437 = vmand %vm435, %vm436
        %438 = vst.msk [vmem:[%s219] sm:$0x3] %vm437, %v432
        %s439 = sand.u32 %s138, 1
        %s440 = scalar_lea.sflag [#allocation4], %s439
        %s441 = sand.u32 %s138, 1
        %s442 = smul.addr %s441, 2
        %s443 = scalar_lea.vmem [#allocation3], %s442
        // Predicated region
        $region41: #{tpu_custom_call.1} parent=39 // pred_check
          %p444 = pneg %p148
        $region42: #{tpu_custom_call.1} parent=39 // pred_check_branch
          %446 = sbr.rel (%p444) target = $region44
        $region43: #{tpu_custom_call.1} parent=39 // pred_region
          %s447 = smul.u32 2, %s20
          %s449 = ssub.s32 32, 32
          %450 = vsyncadd %s440, %s449
          %s451 = smul.addr %s447, 16
          %s452 = scalar_lea.hbm %s5, %s451
          %s454 = sshll.u32 %s443, 4
          %s455 = int_to_ptr.vmem [resolvable:$true] %s454
          %457 = dma.vmem_to_hbm [thread:$0]  %s455, 32, %s452, %s440
        $region44: #{tpu_custom_call.1} parent=39 // pred_fallthru
          _
      $region40: #{tpu_custom_call.1} parent=5 // pred_fallthru
        _
      %p458 = scmp.le.s32.totalorder 2, %s15
      // Predicated region
      $region45: #{tpu_custom_call.1} parent=5 // pred_check
        %p459 = pneg %p458
      $region46: #{tpu_custom_call.1} parent=5 // pred_check_branch
        %461 = sbr.rel (%p459) target = $region48
      $region47: #{tpu_custom_call.1} parent=5 // pred_region
        %s462 = ssub.s32 %s15, 2
        // Predicated region
        $region49: #{tpu_custom_call.1} parent=47 // pred_check
          %p463 = pneg %p154
        $region50: #{tpu_custom_call.1} parent=47 // pred_check_branch
          %465 = sbr.rel (%p463) target = $region52
        $region51: #{tpu_custom_call.1} parent=47 // pred_region
          %s466 = sand.u32 %s139, 1
          %s467 = scalar_lea.sflag [#allocation4], %s466
          %s468 = sand.u32 %s139, 1
          %s469 = smul.addr %s468, 2
          %s470 = scalar_lea.vmem [#allocation3], %s469
          %471 = dma.done %s467, 32
        $region52: #{tpu_custom_call.1} parent=47 // pred_fallthru
          _
      $region48: #{tpu_custom_call.1} parent=5 // pred_fallthru
        _
    $region6: #{tpu_custom_call.1} parent=1 // loop_footer
      %s19 = sadd.s32 1, %s15
    $region7: #{tpu_custom_call.1} parent=1 // loop_footer_branch
      %14 = sbr.rel target = $region3
    $region8: #{tpu_custom_call.1} parent=1 // loop_exit
      _
    %472 = vsyncpa [#allocation4], 1
    %s473 = scalar_lea.sflag [#allocation4], 1
    %474 = vsyncpa %s473, 1

</llo_original>
